<compile_context>
chip_gen: v7x
topology: tpu7x:2x2x1
jax: 0.10.0
libtpu: 0.0.40
codegen_flags: <defaults>
</compile_context>

<pallas_src>
import functools

import jax
import jax.numpy as jnp
from jax.experimental import pallas as pl
from jax.experimental.pallas import tpu as pltpu

_LANES = 128
_SUBLANES = 8
_MIN_SPLIT_ROWS = 1024  # only megacore-split when each half gets >= this many rows


def _round_up(x, m):
    return ((x + m - 1) // m) * m


def _mish_kernel(x_ref, o_ref, *, approx_recip):
    x = x_ref[...].astype(jnp.float32)
    # tanh(softplus(x)) == e*(e+2) / (e*(e+2) + 2), with e = exp(x).
    # For x > 20, tanh(softplus(x)) == 1 to f32 precision; the where() guard
    # also discards the inf/nan lanes produced when exp(x) overflows.
    e = jnp.exp(x)
    num = e * (e + 2.0)
    den = num + 2.0
    if approx_recip:
        # EUP approximate reciprocal + one Newton-Raphson step on the VPU:
        # ~1e-7 relative error, cheaper than a full-precision divide on v7x.
        r = pl.reciprocal(den, approx=True)
        r = r * (2.0 - den * r)
        t = num * r
    else:
        t = num / den
    y = jnp.where(x > 20.0, x, x * t)
    o_ref[...] = y.astype(o_ref.dtype)


def _chip_config():
    """Static (trace-time) per-generation tiling configuration."""
    try:
        kind = jax.devices()[0].device_kind.lower()
    except Exception:  # pragma: no cover - e.g. interpret mode
        kind = ""
    if "v7" in kind:
        # 2 TensorCores, 64 MiB physical VMEM: 8 MiB tiles, raise scoped limit
        # so 4 double-buffered in/out buffers (32 MiB) fit comfortably.
        return dict(num_tc=2, tile_bytes=8 << 20, vmem_limit=48 << 20,
                    approx_recip=True)
    if "v6" in kind:
        # 1 TC, 32 MiB scoped-VMEM default: 4 MiB tiles fit with no flags.
        return dict(num_tc=1, tile_bytes=4 << 20, vmem_limit=None,
                    approx_recip=False)
    if "v5p" in kind or "v4" in kind:
        # Other megacore (2-TC) chips: modest tiles, balanced split.
        return dict(num_tc=2, tile_bytes=4 << 20, vmem_limit=None,
                    approx_recip=False)
    # v5e / unknown: 16 MiB scoped default -> 2 MiB tiles (8 MiB total buffers).
    return dict(num_tc=1, tile_bytes=2 << 20, vmem_limit=None,
                approx_recip=False)


def mish(x, *, donate=False):
    """Elementwise mish(x) = x * tanh(softplus(x)) for any-shaped input."""
    orig_shape = x.shape
    orig_dtype = x.dtype
    n = x.size
    if n == 0:
        return x

    cfg = _chip_config()
    itemsize = jnp.dtype(orig_dtype).itemsize
    # Sublane granule of the packed (sublane, 128) tile: 8 f32, 16 bf16, 32 i8.
    granule = _SUBLANES * max(1, 4 // itemsize)

    # Lane-dense layout. Pad the flat length to a multiple of 128 lanes only;
    # the sublane remainder is handled by the cdiv grid's masked last block, so
    # the extra pad/slice pass only fires when n % 128 != 0.
    # TODO(synk): handle the <128-element tail with a tiny separate op to avoid
    # the full-array pad/slice copies on lane-unaligned shapes.
    flat = jnp.ravel(x)
    pad = (-n) % _LANES
    if pad:
        flat = jnp.pad(flat, (0, pad))
    rows = (n + pad) // _LANES
    x2d = flat.reshape(rows, _LANES)

    # Biggest block that fits the per-chip VMEM budget (double-buffered in+out).
    max_rows = max(granule,
                   (cfg["tile_bytes"] // (_LANES * itemsize)) // granule * granule)

    if rows <= max_rows:
        if cfg["num_tc"] >= 2 and rows >= 2 * _MIN_SPLIT_ROWS:
            # Balanced 2-way split so both TensorCores get ~half the rows.
            br = _round_up(pl.cdiv(rows, 2), granule)
        else:
            # Single block covering the whole array (legal for any `rows`);
            # no forced split on single-TensorCore chips.
            br = rows
    else:
        nblocks = pl.cdiv(rows, max_rows)
        if cfg["num_tc"] >= 2 and nblocks % cfg["num_tc"]:
            nblocks += cfg["num_tc"] - nblocks % cfg["num_tc"]
        br = _round_up(pl.cdiv(rows, nblocks), granule)
    grid = (pl.cdiv(rows, br),)

    n_elems = rows * _LANES
    cost = pl.CostEstimate(
        flops=8 * n_elems,               # mul/add/select per element (rough)
        transcendentals=2 * n_elems,     # exp + reciprocal per element
        bytes_accessed=2 * n_elems * itemsize,
    )

    kernel = functools.partial(_mish_kernel, approx_recip=cfg["approx_recip"])

    out2d = pl.pallas_call(
        kernel,
        out_shape=jax.ShapeDtypeStruct((rows, _LANES), orig_dtype),
        grid_spec=pl.GridSpec(
            grid=grid,
            in_specs=[pl.BlockSpec((br, _LANES), lambda i: (i, 0))],
            out_specs=pl.BlockSpec((br, _LANES), lambda i: (i, 0)),
        ),
        compiler_params=pltpu.CompilerParams(
            dimension_semantics=("parallel",),
            vmem_limit_bytes=cfg["vmem_limit"],
        ),
        cost_estimate=cost,
        input_output_aliases={0: 0} if donate else {},
    )(x2d)

    out_flat = out2d.reshape(-1)
    if pad:
        out_flat = out_flat[:n]
    return out_flat.reshape(orig_shape)


class Mish:
    """JAX/Pallas equivalent of the PyTorch Mish module (no parameters)."""

    def __init__(self, inplace=False):
        # inplace=True maps to pallas input/output aliasing (no second HBM buf).
        self.inplace = inplace

    def __call__(self, x):
        return mish(x, donate=self.inplace)


def _mish_ref(x):
    xf = x.astype(jnp.float32)
    return (xf * jnp.tanh(jnp.logaddexp(xf, 0.0))).astype(x.dtype)


if __name__ == "__main__":
    key = jax.random.PRNGKey(0)
    m = Mish()

    # Primary case: small NCHW feature map (lane-aligned, single-block path).
    x = jax.random.normal(key, (2, 4, 16, 16), dtype=jnp.float32)
    out = jax.block_until_ready(m(x))
    ref = _mish_ref(x)
    assert out.shape == x.shape and out.dtype == x.dtype
    assert jnp.allclose(out, ref, atol=1e-5, rtol=1e-5)

    # Non-lane-aligned shape exercises the (rare) static pad/slice path.
    k1, k2 = jax.random.split(key)
    x_odd = 4.0 * jax.random.normal(k1, (3, 5, 7, 9), dtype=jnp.float32)
    out_odd = jax.block_until_ready(mish(x_odd))
    assert out_odd.shape == x_odd.shape
    assert jnp.allclose(out_odd, _mish_ref(x_odd), atol=1e-5, rtol=1e-5)

    # Larger case (still a single big block on 1-TC chips, balanced on 2-TC).
    x_big = jax.random.normal(k2, (2, 8, 64, 64), dtype=jnp.float32)
    out_big = jax.block_until_ready(mish(x_big))
    assert jnp.allclose(out_big, _mish_ref(x_big), atol=1e-5, rtol=1e-5)

    # bf16 input exercises the dtype-aware sublane granule / packed I/O path.
    x_bf16 = jax.random.normal(key, (2, 4, 16, 16), dtype=jnp.bfloat16)
    out_bf16 = jax.block_until_ready(mish(x_bf16))
    assert out_bf16.dtype == jnp.bfloat16
    assert jnp.allclose(out_bf16.astype(jnp.float32),
                        _mish_ref(x_bf16).astype(jnp.float32),
                        atol=2e-2, rtol=2e-2)

    print("KERNEL_OK")
</pallas_src>

<mosaic_0001>
module attributes {stable_mosaic.version = 11 : i64} {
  func.func @_mish_kernel(%arg0: i32, %arg1: memref<16x128xf32, #tpu.memory_space<vmem>>, %arg2: memref<16x128xf32, #tpu.memory_space<vmem>>) attributes {dimension_semantics = [#tpu.dimension_semantics<parallel>], iteration_bounds = array<i64: 1>, scalar_prefetch = 0 : i64, scratch_operands = 0 : i64, tpu.core_type = #tpu.core_type<tc>, window_params = [{transform_indices = @transform_0, window_bounds = array<i64: 16, 128>}, {transform_indices = @transform_1, window_bounds = array<i64: 16, 128>}]} {
    %c0 = arith.constant 0 : index
    %c0_0 = arith.constant 0 : index
    %0 = vector.load %arg1[%c0, %c0_0] : memref<16x128xf32, #tpu.memory_space<vmem>>, vector<16x128xf32>
    %1 = math.exp %0 : vector<16x128xf32>
    %cst = arith.constant 2.000000e+00 : f32
    %2 = vector.broadcast %cst : f32 to vector<16x128xf32>
    %3 = arith.addf %1, %2 : vector<16x128xf32>
    %4 = arith.mulf %1, %3 : vector<16x128xf32>
    %cst_1 = arith.constant 2.000000e+00 : f32
    %5 = vector.broadcast %cst_1 : f32 to vector<16x128xf32>
    %6 = arith.addf %4, %5 : vector<16x128xf32>
    %7 = arith.divf %4, %6 : vector<16x128xf32>
    %cst_2 = arith.constant 2.000000e+01 : f32
    %8 = vector.broadcast %cst_2 : f32 to vector<16x128xf32>
    %9 = arith.cmpf ogt, %0, %8 : vector<16x128xf32>
    %10 = arith.mulf %0, %7 : vector<16x128xf32>
    %11 = arith.select %9, %0, %10 : vector<16x128xi1>, vector<16x128xf32>
    %c0_3 = arith.constant 0 : index
    %c0_4 = arith.constant 0 : index
    %12 = vector.load %arg2[%c0_3, %c0_4] : memref<16x128xf32, #tpu.memory_space<vmem>>, vector<16x128xf32>
    tpu.vector_store %arg2[%c0_3, %c0_4], %11 {strides = array<i32>} : memref<16x128xf32, #tpu.memory_space<vmem>>, vector<16x128xf32>,
    return
  }
  func.func @transform_0(%arg0: i32) -> (i32, i32) {
    %c0_i32 = arith.constant 0 : i32
    %c0_i32_0 = arith.constant 0 : i32
    return %arg0, %c0_i32 : i32, i32
  }
  func.func @transform_1(%arg0: i32) -> (i32, i32) {
    %c0_i32 = arith.constant 0 : i32
    %c0_i32_0 = arith.constant 0 : i32
    return %arg0, %c0_i32 : i32, i32
  }
}

</mosaic_0001>

<llo_original>
// kernel: tpu_custom_call.1
$region0: #{tpu_custom_call.1}
  #allocation0 [shape = 'u32[]', space=smem, size = 0x4, offset = 0x4, fixed_abs, tag = 'smem constant byte address 0x4 - core index']
  #allocation1 [shape = 'u32[144,128]{1,0:T(1,128)}', space=vmem, size = 0x12000, scoped, tag = 'internal scratch']
  %s0 = inlined_call_operand.hbm [shape: f32[16,128], index: 0, kind: input, shape index: {}]
  %s1 = inlined_call_operand.hbm [shape: f32[16,128], index: 1, kind: output, shape index: {}]
  %s2 = sld [smem:[#allocation0]]
  $region18: #{tpu_custom_call.1} parent=0
    _
  %s4 = ssub.s32 1, %s2
  %s5 = scalar_select 0, %s4, %s2
  $region1: #{tpu_custom_call.1} parent=0
    #allocation2 [shape = 'u8[8192]{0}', space=vmem, size = 0x2000, scoped, tag = 'input window, operand 0, single buffered']
    #allocation3 [shape = 's32[1]{0}', space=sflag, size = 0x4, scoped, tag = 'scoped memory for tpu_custom_call.1']
    #allocation4 [shape = 's32[1]{0}', space=sflag, size = 0x4, scoped, tag = 'scoped memory for tpu_custom_call.1']
    #allocation5 [shape = 'u8[8192]{0}', space=vmem, size = 0x2000, scoped, tag = 'output window, operand 0, single buffered']
    %6 = vsyncpa [#allocation3], 0
    %7 = vsyncpa [#allocation4], 0
    // Predicated region
    $region2: #{tpu_custom_call.1} parent=1 // pred_check
      _
    $region3: #{tpu_custom_call.1} parent=1 // pred_check_branch
      %9 = sbr.rel (0) target = $region5
    $region4: #{tpu_custom_call.1} parent=1 // pred_region
      %s11 = ssub.s32 256, 256
      %12 = vsyncadd [#allocation3], %s11
      %s13 = sshll.u32 [#allocation2], 4
      %s14 = int_to_ptr.vmem [resolvable:$true] %s13
      %19 = dma.hbm_to_vmem [thread:$0]  %s0, 256, %s14, [#allocation3], 128, 128, 8
    $region5: #{tpu_custom_call.1} parent=1 // pred_fallthru
      _
    // Predicated region
    $region6: #{tpu_custom_call.1} parent=1 // pred_check
      _
    $region7: #{tpu_custom_call.1} parent=1 // pred_check_branch
      %21 = sbr.rel (0) target = $region9
    $region8: #{tpu_custom_call.1} parent=1 // pred_region
      %22 = dma.done [#allocation3], 256
    $region9: #{tpu_custom_call.1} parent=1 // pred_fallthru
      _
    %v23 = vld [vmem:[#allocation2] sm:$0xff]
    %v24 = vld [vmem:[#allocation2 + $0x8] sm:$0xff]
    %v25 = vmul.f32 %v23, 1.442695
    %v26 = vpow.pop %v25
    %v27 = vmul.f32 %v24, 1.442695
    %v28 = vpow.pop %v27
    %v29 = vadd.f32 %v26, 2.0
    %v30 = vadd.f32 %v28, 2.0
    %v31 = vmul.f32 %v26, %v29
    %v32 = vmul.f32 %v28, %v30
    %v33 = vadd.f32 %v31, 2.0
    %v34 = vadd.f32 %v32, 2.0
    %v35 = vrcp.pop %v33
    %v36 = vmul.f32 %v31, %v35
    %v37 = vrcp.pop %v34
    %v38 = vmul.f32 %v32, %v37
    %vm39 = vcmp.gt.f32.partialorder %v23, 20.0
    %vm40 = vcmp.gt.f32.partialorder %v24, 20.0
    %v41 = vmul.f32 %v23, %v36
    %v42 = vmul.f32 %v24, %v38
    %v43 = vsel %vm39, %v23, %v41
    %v44 = vsel %vm40, %v24, %v42
    %45 = vst [vmem:[#allocation5] sm:$0xff] %v43
    %46 = vst [vmem:[#allocation5 + $0x8] sm:$0xff] %v44
    // Predicated region
    $region10: #{tpu_custom_call.1} parent=1 // pred_check
      _
    $region11: #{tpu_custom_call.1} parent=1 // pred_check_branch
      %48 = sbr.rel (0) target = $region13
    $region12: #{tpu_custom_call.1} parent=1 // pred_region
      %s50 = ssub.s32 256, 256
      %51 = vsyncadd [#allocation4], %s50
      %s52 = sshll.u32 [#allocation5], 4
      %s53 = int_to_ptr.vmem [resolvable:$true] %s52
      %58 = dma.vmem_to_hbm [thread:$0]  %s53, 256, %s1, [#allocation4], 128, 128, 8
    $region13: #{tpu_custom_call.1} parent=1 // pred_fallthru
      _
    // Predicated region
    $region14: #{tpu_custom_call.1} parent=1 // pred_check
      _
    $region15: #{tpu_custom_call.1} parent=1 // pred_check_branch
      %60 = sbr.rel (0) target = $region17
    $region16: #{tpu_custom_call.1} parent=1 // pred_region
      %61 = dma.done [#allocation4], 256
    $region17: #{tpu_custom_call.1} parent=1 // pred_fallthru
      _
    %62 = vsyncpa [#allocation3], 1
    %63 = vsyncpa [#allocation4], 1

</llo_original>
